<compile_context>
chip_gen: v5e
topology: v5e:2x2
jax: 0.10.0
libtpu: 0.0.40
codegen_flags: <defaults>
</compile_context>

<pallas_src>
import functools
import math

import jax
import jax.numpy as jnp
from jax import lax
from jax.experimental import pallas as pl
from jax.experimental.pallas import tpu as pltpu


def _round_up(x, m):
    return ((x + m - 1) // m) * m


def _uniform(key, shape, bound):
    return jax.random.uniform(key, shape, jnp.float32, minval=-bound, maxval=bound)


# ---------------------------------------------------------------------------
# Kernel 1: fused Module_LS == per-map full-spatial AvgPool -> block-diagonal
# Linear -> ReLU, as ONE matmul against a (sum(C_i), Dp) weight.
# ---------------------------------------------------------------------------
def _module_ls_kernel(*refs, n_feat):
    x_refs = refs[:n_feat]            # each (bt, C_i, HW_i)
    w_ref = refs[n_feat]              # (Ctot, Dp) block-diagonal, 1/HW folded in
    b_ref = refs[n_feat + 1]          # (1, Dp), pad cols zero
    o_ref = refs[n_feat + 2]          # (bt, Dp), lane-dense store
    # Lane reduce each map, then a single lane-concat -> one MXU matmul.
    pooled = jnp.concatenate([jnp.sum(x_r[...], axis=-1) for x_r in x_refs], axis=-1)
    y = jnp.dot(pooled, w_ref[...], preferred_element_type=jnp.float32)
    o_ref[...] = jnp.maximum(y + b_ref[...], 0.0)


def module_ls_fused(features, w_bd, b_cat):
    n_feat = len(features)
    Bp = features[0].shape[0]
    Dp = b_cat.shape[1]
    Ctot = w_bd.shape[0]
    xs = [f.reshape(f.shape[0], f.shape[1], -1) for f in features]     # NCHW -> (B, C, HW)
    elems = sum(x.shape[1] * x.shape[2] for x in xs)                   # per batch row
    bt = min(Bp, 128)
    assert Bp % bt == 0
    cost = pl.CostEstimate(
        flops=int(Bp * elems + 2 * Bp * Ctot * Dp),
        transcendentals=0,
        bytes_accessed=int(4 * (Bp * elems + Ctot * Dp + Dp + Bp * Dp)))
    in_specs = [pl.BlockSpec((bt, x.shape[1], x.shape[2]), lambda b: (b, 0, 0)) for x in xs]
    in_specs += [pl.BlockSpec((Ctot, Dp), lambda b: (0, 0)),
                 pl.BlockSpec((1, Dp), lambda b: (0, 0))]
    return pl.pallas_call(
        functools.partial(_module_ls_kernel, n_feat=n_feat),
        out_shape=jax.ShapeDtypeStruct((Bp, Dp), jnp.float32),
        grid=(Bp // bt,),
        in_specs=in_specs,
        out_specs=pl.BlockSpec((bt, Dp), lambda b: (b, 0)),
        compiler_params=pltpu.CompilerParams(dimension_semantics=("parallel",)),
        cost_estimate=cost,
    )(*xs, w_bd, b_cat)


# ---------------------------------------------------------------------------
# Kernel 2: fused single-layer unidirectional LSTM (zero init state) +
# classifier Linear (+ optional sigmoid).  Packed gate order [i, f, o, g],
# contiguous 4H lanes (no per-gate 128-padding).  The input projection + bias
# (gx) is precomputed lane-dense outside the kernel.  h_t is written to a
# (T, B, H) VMEM scratch; the O=1 classifier runs after the recurrence so it
# never serializes against the recurrent matmul's result path.
# ---------------------------------------------------------------------------
def _lstm_cls_kernel(gx_ref, whh_ref, wc_ref, bc_ref, o_ref, h_scr,
                     *, H, apply_sigmoid, unroll):
    # gx_ref: (T, bt, 4H)  = ent*w_ih + b_ih + b_hh, gate order [i,f,o,g]
    # whh_ref: (H, 4H)     wc_ref: (T, H, O)     bc_ref: (1, O)
    # o_ref: (bt, O)       h_scr: (T, bt, H) VMEM hidden-sequence scratch
    T, Bt, _ = gx_ref.shape
    O = o_ref.shape[1]

    h0 = jnp.zeros((Bt, H), jnp.float32)
    c0 = jnp.zeros((Bt, H), jnp.float32)

    def step(t, carry):
        h, c = carry
        gates = gx_ref[t] + jnp.dot(h, whh_ref[...],
                                    preferred_element_type=jnp.float32)   # (Bt, 4H)
        sig = jax.nn.sigmoid(gates[:, :3 * H])      # only the sigmoid gates
        i_g = sig[:, 0:H]
        f_g = sig[:, H:2 * H]
        o_g = sig[:, 2 * H:3 * H]
        g_g = jnp.tanh(gates[:, 3 * H:4 * H])
        c = f_g * c + i_g * g_g
        h = o_g * jnp.tanh(c)
        h_scr[t] = h                                # hidden never leaves VMEM
        return (h, c)

    lax.fori_loop(0, T, step, (h0, c0), unroll=unroll)

    # Classifier: off the recurrent critical path.
    acc0 = jnp.zeros((Bt, O), jnp.float32)

    def cls_step(t, acc):
        return acc + jnp.dot(h_scr[t], wc_ref[t], preferred_element_type=jnp.float32)

    acc = lax.fori_loop(0, T, cls_step, acc0, unroll=unroll)

    y = acc + bc_ref[...]
    if apply_sigmoid:
        y = jax.nn.sigmoid(y)
    o_ref[...] = y


def lstm_classifier_fused(gx, whh, wc, bc, *, H, apply_sigmoid):
    T, Bp, G = gx.shape
    O = wc.shape[-1]
    bt = min(Bp, 256)
    assert Bp % bt == 0
    cost = pl.CostEstimate(
        flops=int(T * 2 * Bp * H * 4 * H + T * 2 * Bp * H * O),
        transcendentals=int(T * Bp * 5 * H),
        bytes_accessed=int(4 * (T * Bp * G + H * G + T * H * O + O + Bp * O)))
    return pl.pallas_call(
        functools.partial(_lstm_cls_kernel, H=H, apply_sigmoid=apply_sigmoid,
                          unroll=min(int(T), 8)),
        out_shape=jax.ShapeDtypeStruct((Bp, O), jnp.float32),
        grid=(Bp // bt,),
        in_specs=[pl.BlockSpec((T, bt, G), lambda b: (0, b, 0)),
                  pl.BlockSpec((H, G), lambda b: (0, 0)),
                  pl.BlockSpec((T, H, O), lambda b: (0, 0, 0)),
                  pl.BlockSpec((1, O), lambda b: (0, 0))],
        out_specs=pl.BlockSpec((bt, O), lambda b: (b, 0)),
        scratch_shapes=[pltpu.VMEM((T, bt, H), jnp.float32)],
        compiler_params=pltpu.CompilerParams(dimension_semantics=("parallel",)),
        cost_estimate=cost,
    )(gx, whh, wc, bc)


# ---------------------------------------------------------------------------
# gtg_func: the PyTorch module receives this as an external callable; here we
# provide a deterministic plain-JAX stand-in returning (X, entropy_history)
# with entropy_history of shape (B, seq_length), matching the expected API.
# TODO(synk): real GTG dynamics are user-supplied; this is a simple surrogate.
# ---------------------------------------------------------------------------
def make_gtg_func(seq_length, n_classes):
    def gtg_func(ls_features, labels):
        feats = ls_features / (jnp.linalg.norm(ls_features, axis=1, keepdims=True) + 1e-8)
        A = jnp.maximum(feats @ feats.T, 0.0)                          # (B, B)
        X0 = jax.nn.one_hot(labels, n_classes) * 0.9 + 0.1 / n_classes

        def body(X, _):
            Xn = X * (A @ X)
            Xn = Xn / (jnp.sum(Xn, axis=1, keepdims=True) + 1e-8)
            ent = -jnp.sum(Xn * jnp.log(Xn + 1e-8), axis=1)            # (B,)
            return Xn, ent

        Xf, ents = lax.scan(body, X0, xs=None, length=seq_length)      # ents (T, B)
        return Xf, ents.T                                              # (B, T)
    return gtg_func


# ---------------------------------------------------------------------------
# Module_LS_GTG_LSTM (forward) with deterministic, PyTorch-style param init.
# ---------------------------------------------------------------------------
class ModuleLSGTGLSTMPallas:
    def __init__(self, params, input_size, hidden_size, num_layers, output_size,
                 bidirectional, seq_length, gtg_func, is_bin_class=False, key=None):
        # TODO(synk): multi-layer / bidirectional LSTM variants not implemented.
        assert num_layers == 1 and not bidirectional
        # ent_history is (B, T, 1) by construction, so input_size must be 1.
        assert input_size == 1
        self.hidden_size = hidden_size
        self.is_bin_class = is_bin_class
        self.gtg_func = gtg_func
        self.seq_length = seq_length

        num_channels = params["num_channels"]
        feature_sizes = params["feature_sizes"]
        interm = params["interm_dim"]
        n_feat = len(num_channels)
        D = n_feat * interm
        Dp = _round_up(D, 128)           # lane-dense output block
        self.D, self.Dp = D, Dp
        Ctot = sum(num_channels)

        key = jax.random.PRNGKey(42) if key is None else key
        keys = iter(jax.random.split(key, 2 * n_feat + 6))

        # ---- Module_LS params: Linear(n_c, interm) per feature map, stored as one
        # block-diagonal (Ctot, Dp) weight with the 1/(HW) pooling scale folded in.
        # NOTE: pad columns [D, Dp) of w_bd / b_cat are exactly zero (ReLU(0)=0);
        # they are sliced off before gtg.  Keep this invariant on any repack.
        w_bd = jnp.zeros((Ctot, Dp), jnp.float32)
        b_cat = jnp.zeros((1, Dp), jnp.float32)
        self.ls_raw = []
        c_off = 0
        for i, (n_c, e_d) in enumerate(zip(num_channels, feature_sizes)):
            bound = 1.0 / math.sqrt(n_c)
            w = _uniform(next(keys), (n_c, interm), bound)
            b = _uniform(next(keys), (interm,), bound)
            hw = float(e_d * e_d)
            w_bd = w_bd.at[c_off:c_off + n_c, i * interm:(i + 1) * interm].set(w / hw)
            b_cat = b_cat.at[0, i * interm:(i + 1) * interm].set(b)
            self.ls_raw.append((w, b))
            c_off += n_c
        self.w_bd, self.b_cat = w_bd, b_cat

        # ---- LSTM params, PyTorch init U(-1/sqrt(H), 1/sqrt(H)), gate order i,f,g,o.
        H = hidden_size
        bound = 1.0 / math.sqrt(H)
        w_ih = _uniform(next(keys), (4 * H, input_size), bound)   # (4H, 1)
        w_hh = _uniform(next(keys), (4 * H, H), bound)            # (4H, H)
        b_ih = _uniform(next(keys), (4 * H,), bound)
        b_hh = _uniform(next(keys), (4 * H,), bound)

        # raw (unpadded, transposed, PyTorch gate order) for the pure-JAX reference
        self.wih_raw = w_ih.T                                     # (1, 4H)
        self.whh_raw = w_hh.T                                     # (H, 4H)
        self.b_raw = (b_ih + b_hh)[None, :]                       # (1, 4H)

        # Packed gate order [i, f, o, g]: sigmoid gates contiguous in [0, 3H),
        # tanh gate in [3H, 4H).  No per-gate 128-lane padding.
        order = (0, 1, 3, 2)
        self.wih_g = jnp.concatenate([w_ih[g * H:(g + 1) * H, 0] for g in order])            # (4H,)
        self.whh_g = jnp.concatenate([w_hh[g * H:(g + 1) * H, :].T for g in order], axis=1)  # (H, 4H)
        self.b_g = jnp.concatenate([(b_ih + b_hh)[g * H:(g + 1) * H] for g in order])        # (4H,)

        # ---- classifier Linear(seq_length*H, output_size)
        in_cls = seq_length * H
        bound_c = 1.0 / math.sqrt(in_cls)
        wc = _uniform(next(keys), (output_size, in_cls), bound_c)  # PyTorch (O, T*H)
        bc = _uniform(next(keys), (output_size,), bound_c)
        self.wc_raw = wc.T                                         # (T*H, O)
        self.bc = bc[None, :]                                      # (1, O)
        self.wc_p = self.wc_raw.reshape(seq_length, H, output_size)  # (T, H, O)

    # ---- Pallas forward ---------------------------------------------------
    def forward(self, features, weight, labels):
        # NOTE: `weight` must be a static Python int (matches the reference
        # module's `weight: int` annotation).
        B = features[0].shape[0]
        Bp = _round_up(B, 8)                      # f32 sublane tile
        if Bp != B:
            features_p = [jnp.pad(f, ((0, Bp - B),) + ((0, 0),) * (f.ndim - 1))
                          for f in features]
        else:
            features_p = features

        ls_p = module_ls_fused(features_p, self.w_bd, self.b_cat)   # (Bp, Dp)
        ls_features = ls_p[:B, :self.D]
        if weight == 0:
            ls_features = lax.stop_gradient(ls_features)            # .detach(); fwd-only

        ent_hist = self.gtg_func(ls_features, labels)[1]            # (B, T)
        if Bp != B:
            ent_hist = jnp.pad(ent_hist, ((0, Bp - B), (0, 0)))

        # Hoisted input projection + bias (input_size == 1): a tiny lane-dense
        # XLA broadcast; feeds the kernel a pipelinable (T, Bp, 4H) input.
        gx = (ent_hist.T[:, :, None] * self.wih_g[None, None, :]
              + self.b_g[None, None, :])                            # (T, Bp, 4H)

        out = lstm_classifier_fused(gx, self.whh_g, self.wc_p, self.bc,
                                    H=self.hidden_size,
                                    apply_sigmoid=self.is_bin_class)  # (Bp, O)
        return out[:B]

    # ---- pure-JAX reference (correctness check) ----------------------------
    def reference_forward(self, features, weight, labels):
        pooled = [f.reshape(f.shape[0], f.shape[1], -1).mean(axis=-1) for f in features]
        ls = [jnp.maximum(p @ w + b[None, :], 0.0) for p, (w, b) in zip(pooled, self.ls_raw)]
        ls_features = jnp.concatenate(ls, axis=1)
        if weight == 0:
            ls_features = lax.stop_gradient(ls_features)
        ent_hist = self.gtg_func(ls_features, labels)[1]            # (B, T)
        B, T = ent_hist.shape
        H = self.hidden_size
        h = jnp.zeros((B, H), jnp.float32)
        c = jnp.zeros((B, H), jnp.float32)
        outs = []
        for t in range(T):
            gates = ent_hist[:, t:t + 1] @ self.wih_raw + h @ self.whh_raw + self.b_raw
            i_g = jax.nn.sigmoid(gates[:, 0 * H:1 * H])
            f_g = jax.nn.sigmoid(gates[:, 1 * H:2 * H])
            g_g = jnp.tanh(gates[:, 2 * H:3 * H])
            o_g = jax.nn.sigmoid(gates[:, 3 * H:4 * H])
            c = f_g * c + i_g * g_g
            h = o_g * jnp.tanh(c)
            outs.append(h)
        flat = jnp.concatenate(outs, axis=1)                        # (B, T*H)
        y = flat @ self.wc_raw + self.bc
        return jax.nn.sigmoid(y) if self.is_bin_class else y


if __name__ == "__main__":
    jax.config.update("jax_default_matmul_precision", "highest")
    key = jax.random.PRNGKey(0)
    k1, k2, k3 = jax.random.split(key, 3)

    B = 2
    params = {"feature_sizes": [16, 8], "num_channels": [4, 8], "interm_dim": 16}
    seq_length = 8
    hidden_size = 32
    input_size = 1
    output_size = 1
    n_classes = 4

    features = [
        jax.random.normal(k1, (B, 4, 16, 16), jnp.float32),
        jax.random.normal(k2, (B, 8, 8, 8), jnp.float32),
    ]
    labels = jnp.array([0, 2], dtype=jnp.int32)

    model = ModuleLSGTGLSTMPallas(
        params, input_size=input_size, hidden_size=hidden_size, num_layers=1,
        output_size=output_size, bidirectional=False, seq_length=seq_length,
        gtg_func=make_gtg_func(seq_length, n_classes), is_bin_class=False, key=k3)

    out = model.forward(features, weight=1, labels=labels)
    ref = model.reference_forward(features, weight=1, labels=labels)
    jax.block_until_ready((out, ref))

    assert out.shape == (B, output_size)
    assert jnp.allclose(out, ref, atol=5e-3, rtol=5e-3), (out, ref)
    print("KERNEL_OK")
</pallas_src>

<mosaic_0001>
module attributes {stable_mosaic.version = 11 : i64} {
  func.func @_module_ls_kernel(%arg0: i32, %arg1: memref<8x4x256xf32, #tpu.memory_space<vmem>>, %arg2: memref<8x8x64xf32, #tpu.memory_space<vmem>>, %arg3: memref<12x128xf32, #tpu.memory_space<vmem>>, %arg4: memref<1x128xf32, #tpu.memory_space<vmem>>, %arg5: memref<8x128xf32, #tpu.memory_space<vmem>>) attributes {dimension_semantics = [#tpu.dimension_semantics<parallel>], iteration_bounds = array<i64: 1>, scalar_prefetch = 0 : i64, scratch_operands = 0 : i64, tpu.core_type = #tpu.core_type<tc>, window_params = [{transform_indices = @transform_0, window_bounds = array<i64: 8, 4, 256>}, {transform_indices = @transform_1, window_bounds = array<i64: 8, 8, 64>}, {pipeline_mode = #tpu.pipeline_mode<synchronous>, transform_indices = @transform_2, window_bounds = array<i64: 12, 128>}, {pipeline_mode = #tpu.pipeline_mode<synchronous>, transform_indices = @transform_3, window_bounds = array<i64: 1, 128>}, {transform_indices = @transform_4, window_bounds = array<i64: 8, 128>}]} {
    %c0 = arith.constant 0 : index
    %c0_0 = arith.constant 0 : index
    %c0_1 = arith.constant 0 : index
    %0 = vector.load %arg1[%c0, %c0_0, %c0_1] : memref<8x4x256xf32, #tpu.memory_space<vmem>>, vector<8x4x256xf32>
    %cst = arith.constant dense<0.000000e+00> : vector<8x4xf32>
    %1 = vector.multi_reduction <add>, %0, %cst [2] : vector<8x4x256xf32> to vector<8x4xf32>
    %c0_2 = arith.constant 0 : index
    %c0_3 = arith.constant 0 : index
    %c0_4 = arith.constant 0 : index
    %2 = vector.load %arg2[%c0_2, %c0_3, %c0_4] : memref<8x8x64xf32, #tpu.memory_space<vmem>>, vector<8x8x64xf32>
    %cst_5 = arith.constant dense<0.000000e+00> : vector<8x8xf32>
    %3 = vector.multi_reduction <add>, %2, %cst_5 [2] : vector<8x8x64xf32> to vector<8x8xf32>
    %4 = tpu.concatenate %1, %3 in 1 : vector<8x4xf32>, vector<8x8xf32> -> vector<8x12xf32>
    %c0_6 = arith.constant 0 : index
    %c0_7 = arith.constant 0 : index
    %5 = vector.load %arg3[%c0_6, %c0_7] : memref<12x128xf32, #tpu.memory_space<vmem>>, vector<12x128xf32>
    %cst_8 = arith.constant dense<0.000000e+00> : vector<8x128xf32>
    %6 = tpu.matmul %4, %5, %cst_8 {dimension_numbers = #tpu.dot_dimension_numbers<[1], [0], [0], [1], [0, 0, 1, 1], [], []>, precision = #tpu.contract_precision<fp32>} : vector<8x12xf32>, vector<12x128xf32>, vector<8x128xf32> -> vector<8x128xf32>
    %c0_9 = arith.constant 0 : index
    %c0_10 = arith.constant 0 : index
    %7 = vector.load %arg4[%c0_9, %c0_10] : memref<1x128xf32, #tpu.memory_space<vmem>>, vector<1x128xf32>
    %8 = vector.broadcast %7 : vector<1x128xf32> to vector<8x128xf32>
    %9 = arith.addf %6, %8 : vector<8x128xf32>
    %cst_11 = arith.constant 0.000000e+00 : f32
    %10 = vector.broadcast %cst_11 : f32 to vector<8x128xf32>
    %11 = arith.maximumf %9, %10 : vector<8x128xf32>
    %c0_12 = arith.constant 0 : index
    %c0_13 = arith.constant 0 : index
    %12 = vector.load %arg5[%c0_12, %c0_13] : memref<8x128xf32, #tpu.memory_space<vmem>>, vector<8x128xf32>
    tpu.vector_store %arg5[%c0_12, %c0_13], %11 {strides = array<i32>} : memref<8x128xf32, #tpu.memory_space<vmem>>, vector<8x128xf32>,
    return
  }
  func.func @transform_0(%arg0: i32) -> (i32, i32, i32) {
    %c0_i32 = arith.constant 0 : i32
    %c0_i32_0 = arith.constant 0 : i32
    %c0_i32_1 = arith.constant 0 : i32
    return %arg0, %c0_i32, %c0_i32_0 : i32, i32, i32
  }
  func.func @transform_1(%arg0: i32) -> (i32, i32, i32) {
    %c0_i32 = arith.constant 0 : i32
    %c0_i32_0 = arith.constant 0 : i32
    %c0_i32_1 = arith.constant 0 : i32
    return %arg0, %c0_i32, %c0_i32_0 : i32, i32, i32
  }
  func.func @transform_2(%arg0: i32) -> (i32, i32) {
    %c0_i32 = arith.constant 0 : i32
    %c0_i32_0 = arith.constant 0 : i32
    %c0_i32_1 = arith.constant 0 : i32
    return %c0_i32, %c0_i32_0 : i32, i32
  }
  func.func @transform_3(%arg0: i32) -> (i32, i32) {
    %c0_i32 = arith.constant 0 : i32
    %c0_i32_0 = arith.constant 0 : i32
    %c0_i32_1 = arith.constant 0 : i32
    return %c0_i32, %c0_i32_0 : i32, i32
  }
  func.func @transform_4(%arg0: i32) -> (i32, i32) {
    %c0_i32 = arith.constant 0 : i32
    %c0_i32_0 = arith.constant 0 : i32
    return %arg0, %c0_i32 : i32, i32
  }
}

</mosaic_0001>

<llo_original>
// kernel: tpu_custom_call.1
$region0: #{tpu_custom_call.1}
  #allocation0 [shape = 'u32[]', space=smem, size = 0x4, offset = 0x4, fixed_abs, tag = 'smem constant byte address 0x4 - core index']
  #allocation1 [shape = 'u32[72,128]{1,0:T(1,128)}', space=vmem, size = 0x9000, scoped, tag = 'internal scratch']
  %s0 = inlined_call_operand.hbm [shape: f32[8,4,256], index: 0, kind: input, shape index: {}]
  %s1 = inlined_call_operand.hbm [shape: f32[8,8,64], index: 1, kind: input, shape index: {}]
  %s2 = inlined_call_operand.hbm [shape: f32[12,128], index: 2, kind: input, shape index: {}]
  %s3 = inlined_call_operand.vmem [shape: f32[1,128], index: 3, kind: input, shape index: {}]
  %s4 = inlined_call_operand.hbm [shape: f32[8,128], index: 4, kind: output, shape index: {}]
  %s5 = sld [smem:[#allocation0]]
  $region38: #{tpu_custom_call.1} parent=0
    _
  %s7 = ssub.s32 1, %s5
  %s8 = scalar_select 0, %s7, %s5
  $region1: #{tpu_custom_call.1} parent=0
    #allocation2 [shape = 'u8[32768]{0}', space=vmem, size = 0x8000, scoped, tag = 'input window, operand 0, single buffered']
    #allocation3 [shape = 's32[1]{0}', space=sflag, size = 0x4, scoped, tag = 'scoped memory for tpu_custom_call.1']
    #allocation4 [shape = 's32[1]{0}', space=sflag, size = 0x4, scoped, tag = 'scoped memory for tpu_custom_call.1']
    #allocation5 [shape = 'u8[32768]{0}', space=vmem, size = 0x8000, scoped, tag = 'input window, operand 1, single buffered']
    #allocation6 [shape = 's32[1]{0}', space=sflag, size = 0x4, scoped, tag = 'scoped memory for tpu_custom_call.1']
    #allocation7 [shape = 'u8[8192]{0}', space=vmem, size = 0x2000, scoped, tag = 'input window, operand 2, single buffered']
    #allocation8 [shape = 'u8[4096]{0}', space=vmem, size = 0x1000, scoped, tag = 'output window, operand 0, single buffered']
    %9 = vsyncpa [#allocation3], 0
    %10 = vsyncpa [#allocation6], 0
    %11 = vsyncpa [#allocation4], 0
    // Predicated region
    $region2: #{tpu_custom_call.1} parent=1 // pred_check
      _
    $region3: #{tpu_custom_call.1} parent=1 // pred_check_branch
      %13 = sbr.rel (0) target = $region5
    $region4: #{tpu_custom_call.1} parent=1 // pred_region
      %15 = vsyncadd [#allocation3], 0
      %s16 = sshll.u32 %s0, 4
      %s17 = int_to_ptr.hbm [resolvable:$true] %s16
      %s18 = sshll.u32 [#allocation2], 4
      %s19 = int_to_ptr.vmem [resolvable:$true] %s18
      %24 = dma.hbm_to_vmem [thread:$0]  %s17, 1024, %s19, [#allocation3], 128, 128, 8
    $region5: #{tpu_custom_call.1} parent=1 // pred_fallthru
      _
    // Predicated region
    $region6: #{tpu_custom_call.1} parent=1 // pred_check
      _
    $region7: #{tpu_custom_call.1} parent=1 // pred_check_branch
      %26 = sbr.rel (0) target = $region9
    $region8: #{tpu_custom_call.1} parent=1 // pred_region
      %28 = vsyncadd [#allocation6], 0
      %s29 = sshll.u32 %s1, 4
      %s30 = int_to_ptr.hbm [resolvable:$true] %s29
      %s31 = sshll.u32 [#allocation5], 4
      %s32 = int_to_ptr.vmem [resolvable:$true] %s31
      %37 = dma.hbm_to_vmem [thread:$0]  %s30, 1024, %s32, [#allocation6], 128, 128, 8
    $region9: #{tpu_custom_call.1} parent=1 // pred_fallthru
      _
    // Predicated region
    $region10: #{tpu_custom_call.1} parent=1 // pred_check
      _
    $region11: #{tpu_custom_call.1} parent=1 // pred_check_branch
      %39 = sbr.rel (0) target = $region13
    $region12: #{tpu_custom_call.1} parent=1 // pred_region
      %41 = vsyncadd [#allocation6], 0
      %s42 = sshll.u32 %s2, 4
      %s43 = int_to_ptr.hbm [resolvable:$true] %s42
      %s44 = sshll.u32 [#allocation7], 4
      %s45 = int_to_ptr.vmem [resolvable:$true] %s44
      %50 = dma.hbm_to_vmem [thread:$0]  %s43, 256, %s45, [#allocation6], 128, 128, 8
    $region13: #{tpu_custom_call.1} parent=1 // pred_fallthru
      _
    // Predicated region
    $region14: #{tpu_custom_call.1} parent=1 // pred_check
      _
    $region15: #{tpu_custom_call.1} parent=1 // pred_check_branch
      %52 = sbr.rel (0) target = $region17
    $region16: #{tpu_custom_call.1} parent=1 // pred_region
      _
    $region17: #{tpu_custom_call.1} parent=1 // pred_fallthru
      _
    // Predicated region
    $region18: #{tpu_custom_call.1} parent=1 // pred_check
      _
    $region19: #{tpu_custom_call.1} parent=1 // pred_check_branch
      %54 = sbr.rel (0) target = $region21
    $region20: #{tpu_custom_call.1} parent=1 // pred_region
      %56 = dma.done [#allocation3], 1024
    $region21: #{tpu_custom_call.1} parent=1 // pred_fallthru
      _
    // Predicated region
    $region22: #{tpu_custom_call.1} parent=1 // pred_check
      _
    $region23: #{tpu_custom_call.1} parent=1 // pred_check_branch
      %58 = sbr.rel (0) target = $region25
    $region24: #{tpu_custom_call.1} parent=1 // pred_region
      %60 = dma.done [#allocation6], 1024
    $region25: #{tpu_custom_call.1} parent=1 // pred_fallthru
      _
    // Predicated region
    $region26: #{tpu_custom_call.1} parent=1 // pred_check
      _
    $region27: #{tpu_custom_call.1} parent=1 // pred_check_branch
      %62 = sbr.rel (0) target = $region29
    $region28: #{tpu_custom_call.1} parent=1 // pred_region
      %64 = dma.done [#allocation6], 256
    $region29: #{tpu_custom_call.1} parent=1 // pred_fallthru
      _
    %v65 = vld [vmem:[#allocation2] sm:$0xff]
    %v66 = vld [vmem:[#allocation2 + $0x8] sm:$0xff]
    %v67 = vld [vmem:[#allocation2 + $0x10] sm:$0xff]
    %v68 = vld [vmem:[#allocation2 + $0x18] sm:$0xff]
    %v69 = vld [vmem:[#allocation2 + $0x20] sm:$0xff]
    %v70 = vld [vmem:[#allocation2 + $0x28] sm:$0xff]
    %v71 = vld [vmem:[#allocation2 + $0x30] sm:$0xff]
    %v72 = vld [vmem:[#allocation2 + $0x38] sm:$0xff]
    %81 = vst [vmem:[#allocation1] ss:$2 sm:$0xff] %v65
    %v82 = vld.sshfl [vmem:[#allocation1] sm:$0xff pattern:$0x75316420]
    %v83 = vld.sshfl [vmem:[#allocation1 + $0x8] sm:$0xff pattern:$0x75316420]
    %s84 = scalar_lea.vmem [#allocation1], 16
    %85 = vst [vmem:[%s84] ss:$2 sm:$0xff] %v66
    %v86 = vld.sshfl [vmem:[#allocation1 + $0x10] sm:$0xff pattern:$0x75316420]
    %v87 = vld.sshfl [vmem:[#allocation1 + $0x18] sm:$0xff pattern:$0x75316420]
    %s88 = scalar_lea.vmem [#allocation1], 32
    %89 = vst [vmem:[%s88] ss:$2 sm:$0xff] %v67
    %v90 = vld.sshfl [vmem:[#allocation1 + $0x20] sm:$0xff pattern:$0x75316420]
    %v91 = vld.sshfl [vmem:[#allocation1 + $0x28] sm:$0xff pattern:$0x75316420]
    %s92 = scalar_lea.vmem [#allocation1], 48
    %93 = vst [vmem:[%s92] ss:$2 sm:$0xff] %v68
    %v94 = vld.sshfl [vmem:[#allocation1 + $0x30] sm:$0xff pattern:$0x75316420]
    %v95 = vld.sshfl [vmem:[#allocation1 + $0x38] sm:$0xff pattern:$0x75316420]
    %96 = vst [vmem:[#allocation1] ss:$2 sm:$0xff] %v69
    %v97 = vld.sshfl [vmem:[#allocation1] sm:$0xff pattern:$0x75316420]
    %v98 = vld.sshfl [vmem:[#allocation1 + $0x8] sm:$0xff pattern:$0x75316420]
    %99 = vst [vmem:[%s84] ss:$2 sm:$0xff] %v70
    %v100 = vld.sshfl [vmem:[#allocation1 + $0x10] sm:$0xff pattern:$0x75316420]
    %v101 = vld.sshfl [vmem:[#allocation1 + $0x18] sm:$0xff pattern:$0x75316420]
    %102 = vst [vmem:[%s88] ss:$2 sm:$0xff] %v71
    %v103 = vld.sshfl [vmem:[#allocation1 + $0x20] sm:$0xff pattern:$0x75316420]
    %v104 = vld.sshfl [vmem:[#allocation1 + $0x28] sm:$0xff pattern:$0x75316420]
    %105 = vst [vmem:[%s92] ss:$2 sm:$0xff] %v72
    %v106 = vld.sshfl [vmem:[#allocation1 + $0x30] sm:$0xff pattern:$0x75316420]
    %v107 = vld.sshfl [vmem:[#allocation1 + $0x38] sm:$0xff pattern:$0x75316420]
    %vm124 = vcmask 1043456
    %v125 = vsel %vm124, %v82, 0.0
    %v126 = vsel %vm124, %v83, 0.0
    %v127 = vadd.f32 %v125, %v126
    %128 = vadd.xlane.f32.xlu0 %v127
    %v129 = vpop.xlane.xlu0 %128
    %v130 = vsel %vm124, %v86, 0.0
    %v131 = vsel %vm124, %v87, 0.0
    %v132 = vadd.f32 %v130, %v131
    %133 = vadd.xlane.f32.xlu0 %v132
    %v134 = vpop.xlane.xlu0 %133
    %v135 = vsel %vm124, %v90, 0.0
    %v136 = vsel %vm124, %v91, 0.0
    %v137 = vadd.f32 %v135, %v136
    %138 = vadd.xlane.f32.xlu0 %v137
    %v139 = vpop.xlane.xlu0 %138
    %v140 = vsel %vm124, %v94, 0.0
    %v141 = vsel %vm124, %v95, 0.0
    %v142 = vadd.f32 %v140, %v141
    %143 = vadd.xlane.f32.xlu0 %v142
    %v144 = vpop.xlane.xlu0 %143
    %v145 = vsel %vm124, %v97, 0.0
    %v146 = vsel %vm124, %v98, 0.0
    %v147 = vadd.f32 %v145, %v146
    %148 = vadd.xlane.f32.xlu0 %v147
    %v149 = vpop.xlane.xlu0 %148
    %v150 = vsel %vm124, %v100, 0.0
    %v151 = vsel %vm124, %v101, 0.0
    %v152 = vadd.f32 %v150, %v151
    %153 = vadd.xlane.f32.xlu0 %v152
    %v154 = vpop.xlane.xlu0 %153
    %v155 = vsel %vm124, %v103, 0.0
    %v156 = vsel %vm124, %v104, 0.0
    %v157 = vadd.f32 %v155, %v156
    %158 = vadd.xlane.f32.xlu0 %v157
    %v159 = vpop.xlane.xlu0 %158
    %v160 = vsel %vm124, %v106, 0.0
    %v161 = vsel %vm124, %v107, 0.0
    %v162 = vadd.f32 %v160, %v161
    %163 = vadd.xlane.f32.xlu0 %v162
    %v164 = vpop.xlane.xlu0 %163
    %v165 = vld [vmem:[#allocation5] sm:$0xff]
    %v166 = vld [vmem:[#allocation5 + $0x8] sm:$0xff]
    %v167 = vld [vmem:[#allocation5 + $0x10] sm:$0xff]
    %v168 = vld [vmem:[#allocation5 + $0x18] sm:$0xff]
    %v169 = vld [vmem:[#allocation5 + $0x20] sm:$0xff]
    %v170 = vld [vmem:[#allocation5 + $0x28] sm:$0xff]
    %v171 = vld [vmem:[#allocation5 + $0x30] sm:$0xff]
    %v172 = vld [vmem:[#allocation5 + $0x38] sm:$0xff]
    %vm173 = vcmask 523264
    %v174 = vsel %vm173, %v165, 0.0
    %175 = vadd.xlane.f32.xlu0 %v174
    %v176 = vpop.xlane.xlu0 %175
    %v177 = vsel %vm173, %v166, 0.0
    %178 = vadd.xlane.f32.xlu0 %v177
    %v179 = vpop.xlane.xlu0 %178
    %v180 = vsel %vm173, %v167, 0.0
    %181 = vadd.xlane.f32.xlu0 %v180
    %v182 = vpop.xlane.xlu0 %181
    %v183 = vsel %vm173, %v168, 0.0
    %184 = vadd.xlane.f32.xlu0 %v183
    %v185 = vpop.xlane.xlu0 %184
    %v186 = vsel %vm173, %v169, 0.0
    %187 = vadd.xlane.f32.xlu0 %v186
    %v188 = vpop.xlane.xlu0 %187
    %v189 = vsel %vm173, %v170, 0.0
    %190 = vadd.xlane.f32.xlu0 %v189
    %v191 = vpop.xlane.xlu0 %190
    %v192 = vsel %vm173, %v171, 0.0
    %193 = vadd.xlane.f32.xlu0 %v192
    %v194 = vpop.xlane.xlu0 %193
    %v195 = vsel %vm173, %v172, 0.0
    %196 = vadd.xlane.f32.xlu0 %v195
    %v197 = vpop.xlane.xlu0 %196
    %v206 = vlaneseq
    %v207 = vand.u32 %v206, 127
    %v208 = vperm.slane %v129, %v207
    %v209 = vperm.slane %v134, %v207
    %v210 = vperm.slane %v139, %v207
    %v211 = vperm.slane %v144, %v207
    %v212 = vperm.slane %v149, %v207
    %v213 = vperm.slane %v154, %v207
    %v214 = vperm.slane %v159, %v207
    %v215 = vperm.slane %v164, %v207
    %vm216 = vcmask 1041409
    %v217 = vsel %vm216, %v209, %v208
    %vm218 = vcmask 1042434
    %v219 = vsel %vm218, %v210, %v217
    %vm220 = vcmask 1043459
    %v221 = vsel %vm220, %v211, %v219
    %vm222 = vcmask 1044484
    %v223 = vsel %vm222, %v212, %v221
    %vm224 = vcmask 1045509
    %v225 = vsel %vm224, %v213, %v223
    %vm226 = vcmask 1046534
    %v227 = vsel %vm226, %v214, %v225
    %vm228 = vcmask 1047559
    %v229 = vsel %vm228, %v215, %v227
    %v239 = vadd.s32 %v207, 4294967292
    %v240 = vperm.slane %v176, %v239
    %v241 = vperm.slane %v179, %v239
    %v242 = vperm.slane %v182, %v239
    %v243 = vperm.slane %v185, %v239
    %v244 = vperm.slane %v188, %v239
    %v245 = vperm.slane %v191, %v239
    %v246 = vperm.slane %v194, %v239
    %v247 = vperm.slane %v197, %v239
    %v248 = vsel %vm216, %v241, %v240
    %v249 = vsel %vm218, %v242, %v248
    %v250 = vsel %vm220, %v243, %v249
    %v251 = vsel %vm222, %v244, %v250
    %v252 = vsel %vm224, %v245, %v251
    %v253 = vsel %vm226, %v246, %v252
    %v254 = vsel %vm228, %v247, %v253
    %vm256 = vcmask 31744
    %v257 = vsel %vm256, %v229, %v254
    %v258 = vld [vmem:[#allocation7] sm:$0xff]
    %v259 = vld [vmem:[#allocation7 + $0x8] sm:$0xf]
    %v260 = vld [vmem:[%s3] sm:$0x1]
    %v262 = vperm.slane %v260, 0
    %vm264 = vcmask 97280
    %v266 = vsel %vm264, %v257, 0
    %v269 = vsel %vm124, %v259, 0
    %271 = vmatpush.msra.mxu0 0.0
    %272 = vmatpush.msra.mxu0 0.0
    %273 = vmatpush.msra.mxu0 0.0
    %274 = vmatpush.msra.mxu0 0.0
    %275 = vmatpush.msra.mxu0 0.0
    %276 = vmatpush.msra.mxu0 0.0
    %277 = vmatpush.msra.mxu0 0.0
    %278 = vmatpush.msra.mxu0 0.0
    %279 = vmatpush.msra.mxu0 0.0
    %280 = vmatpush.msra.mxu0 0.0
    %281 = vmatpush.msra.mxu0 0.0
    %282 = vmatpush.msra.mxu0 0.0
    %283 = vmatpush.msra.mxu0 0.0
    %284 = vmatpush.msra.mxu0 0.0
    %v285 = vand.u32 %v269, 4294901760
    %286 = vmatpush.msra.mxu0 %v285
    %v287 = vand.u32 %v258, 4294901760
    %288 = vmatpush.msra.mxu0 %v287
    %v289 = vand.u32 %v266, 4294901760
    %v290 = vsub.f32 %v266, %v289
    %v291 = vand.u32 %v290, 4294901760
    %v292 = vsub.f32 %v290, %v291
    %v293 = vand.u32 %v292, 4294901760
    %294 = vmatmul.f32.gmra.mxu0 %v293
    %v295 = vpop.f32.mrf.mxu0
    %v296 = vadd.f32 %v262, %v295
    %297 = vdwg.mxu0
    %298 = vmatpush.msra.mxu0 0.0
    %299 = vmatpush.msra.mxu0 0.0
    %300 = vmatpush.msra.mxu0 0.0
    %301 = vmatpush.msra.mxu0 0.0
    %302 = vmatpush.msra.mxu0 0.0
    %303 = vmatpush.msra.mxu0 0.0
    %304 = vmatpush.msra.mxu0 0.0
    %305 = vmatpush.msra.mxu0 0.0
    %306 = vmatpush.msra.mxu0 0.0
    %307 = vmatpush.msra.mxu0 0.0
    %308 = vmatpush.msra.mxu0 0.0
    %309 = vmatpush.msra.mxu0 0.0
    %310 = vmatpush.msra.mxu0 0.0
    %311 = vmatpush.msra.mxu0 0.0
    %v312 = vand.u32 %v269, 4294901760
    %v313 = vsub.f32 %v269, %v312
    %v314 = vand.u32 %v313, 4294901760
    %v315 = vsub.f32 %v313, %v314
    %v316 = vand.u32 %v315, 4294901760
    %317 = vmatpush.msra.mxu0 %v316
    %v318 = vand.u32 %v258, 4294901760
    %v319 = vsub.f32 %v258, %v318
    %v320 = vand.u32 %v319, 4294901760
    %v321 = vsub.f32 %v319, %v320
    %v322 = vand.u32 %v321, 4294901760
    %323 = vmatpush.msra.mxu0 %v322
    %v324 = vand.u32 %v266, 4294901760
    %325 = vmatmul.f32.gmra.mxu0 %v324
    %v326 = vpop.f32.mrf.mxu0
    %v327 = vadd.f32 %v296, %v326
    %328 = vdwg.mxu0
    %329 = vmatpush.msra.mxu0 0.0
    %330 = vmatpush.msra.mxu0 0.0
    %331 = vmatpush.msra.mxu0 0.0
    %332 = vmatpush.msra.mxu0 0.0
    %333 = vmatpush.msra.mxu0 0.0
    %334 = vmatpush.msra.mxu0 0.0
    %335 = vmatpush.msra.mxu0 0.0
    %336 = vmatpush.msra.mxu0 0.0
    %337 = vmatpush.msra.mxu0 0.0
    %338 = vmatpush.msra.mxu0 0.0
    %339 = vmatpush.msra.mxu0 0.0
    %340 = vmatpush.msra.mxu0 0.0
    %341 = vmatpush.msra.mxu0 0.0
    %342 = vmatpush.msra.mxu0 0.0
    %v343 = vand.u32 %v269, 4294901760
    %v344 = vsub.f32 %v269, %v343
    %345 = vmatpush.msra.mxu0 %v344
    %v346 = vand.u32 %v258, 4294901760
    %v347 = vsub.f32 %v258, %v346
    %348 = vmatpush.msra.mxu0 %v347
    %v349 = vand.u32 %v266, 4294901760
    %v350 = vsub.f32 %v266, %v349
    %351 = vmatmul.f32.gmra.mxu0 %v350
    %v352 = vpop.f32.mrf.mxu0
    %v353 = vadd.f32 %v327, %v352
    %354 = vdwg.mxu0
    %355 = vmatpush.msra.mxu0 0.0
    %356 = vmatpush.msra.mxu0 0.0
    %357 = vmatpush.msra.mxu0 0.0
    %358 = vmatpush.msra.mxu0 0.0
    %359 = vmatpush.msra.mxu0 0.0
    %360 = vmatpush.msra.mxu0 0.0
    %361 = vmatpush.msra.mxu0 0.0
    %362 = vmatpush.msra.mxu0 0.0
    %363 = vmatpush.msra.mxu0 0.0
    %364 = vmatpush.msra.mxu0 0.0
    %365 = vmatpush.msra.mxu0 0.0
    %366 = vmatpush.msra.mxu0 0.0
    %367 = vmatpush.msra.mxu0 0.0
    %368 = vmatpush.msra.mxu0 0.0
    %v369 = vand.u32 %v269, 4294901760
    %370 = vmatpush.msra.mxu0 %v369
    %v371 = vand.u32 %v258, 4294901760
    %372 = vmatpush.msra.mxu0 %v371
    %v373 = vand.u32 %v266, 4294901760
    %v374 = vsub.f32 %v266, %v373
    %v375 = vand.u32 %v374, 4294901760
    %376 = vmatmul.f32.gmra.mxu0 %v375
    %v377 = vpop.f32.mrf.mxu0
    %v378 = vadd.f32 %v353, %v377
    %379 = vdwg.mxu0
    %380 = vmatpush.msra.mxu0 0.0
    %381 = vmatpush.msra.mxu0 0.0
    %382 = vmatpush.msra.mxu0 0.0
    %383 = vmatpush.msra.mxu0 0.0
    %384 = vmatpush.msra.mxu0 0.0
    %385 = vmatpush.msra.mxu0 0.0
    %386 = vmatpush.msra.mxu0 0.0
    %387 = vmatpush.msra.mxu0 0.0
    %388 = vmatpush.msra.mxu0 0.0
    %389 = vmatpush.msra.mxu0 0.0
    %390 = vmatpush.msra.mxu0 0.0
    %391 = vmatpush.msra.mxu0 0.0
    %392 = vmatpush.msra.mxu0 0.0
    %393 = vmatpush.msra.mxu0 0.0
    %v394 = vand.u32 %v269, 4294901760
    %v395 = vsub.f32 %v269, %v394
    %v396 = vand.u32 %v395, 4294901760
    %397 = vmatpush.msra.mxu0 %v396
    %v398 = vand.u32 %v258, 4294901760
    %v399 = vsub.f32 %v258, %v398
    %v400 = vand.u32 %v399, 4294901760
    %401 = vmatpush.msra.mxu0 %v400
    %v402 = vand.u32 %v266, 4294901760
    %403 = vmatmul.f32.gmra.mxu0 %v402
    %v404 = vpop.f32.mrf.mxu0
    %v405 = vadd.f32 %v378, %v404
    %406 = vdwg.mxu0
    %407 = vmatpush.msra.mxu0 0.0
    %408 = vmatpush.msra.mxu0 0.0
    %409 = vmatpush.msra.mxu0 0.0
    %410 = vmatpush.msra.mxu0 0.0
    %411 = vmatpush.msra.mxu0 0.0
    %412 = vmatpush.msra.mxu0 0.0
    %413 = vmatpush.msra.mxu0 0.0
    %414 = vmatpush.msra.mxu0 0.0
    %415 = vmatpush.msra.mxu0 0.0
    %416 = vmatpush.msra.mxu0 0.0
    %417 = vmatpush.msra.mxu0 0.0
    %418 = vmatpush.msra.mxu0 0.0
    %419 = vmatpush.msra.mxu0 0.0
    %420 = vmatpush.msra.mxu0 0.0
    %v421 = vand.u32 %v269, 4294901760
    %422 = vmatpush.msra.mxu0 %v421
    %v423 = vand.u32 %v258, 4294901760
    %424 = vmatpush.msra.mxu0 %v423
    %v425 = vand.u32 %v266, 4294901760
    %426 = vmatmul.f32.gmra.mxu0 %v425
    %v427 = vpop.f32.mrf.mxu0
    %v428 = vadd.f32 %v405, %v427
    %429 = vdwg.mxu0
    %v430 = vmax.f32 %v428, 0.0
    %431 = vst [vmem:[#allocation8] sm:$0xff] %v430
    // Predicated region
    $region30: #{tpu_custom_call.1} parent=1 // pred_check
      _
    $region31: #{tpu_custom_call.1} parent=1 // pred_check_branch
      %433 = sbr.rel (0) target = $region33
    $region32: #{tpu_custom_call.1} parent=1 // pred_region
      %435 = vsyncadd [#allocation4], 0
      %s437 = sshll.u32 [#allocation8], 4
      %s438 = int_to_ptr.vmem [resolvable:$true] %s437
      %s439 = sshll.u32 %s4, 4
      %s440 = int_to_ptr.hbm [resolvable:$true] %s439
      %442 = dma.vmem_to_hbm [thread:$0]  %s438, 128, %s440, [#allocation4]
    $region33: #{tpu_custom_call.1} parent=1 // pred_fallthru
      _
    // Predicated region
    $region34: #{tpu_custom_call.1} parent=1 // pred_check
      _
    $region35: #{tpu_custom_call.1} parent=1 // pred_check_branch
      %444 = sbr.rel (0) target = $region37
    $region36: #{tpu_custom_call.1} parent=1 // pred_region
      %446 = dma.done [#allocation4], 128
    $region37: #{tpu_custom_call.1} parent=1 // pred_fallthru
      _
    %447 = vsyncpa [#allocation3], 1
    %448 = vsyncpa [#allocation6], 1
    %449 = vsyncpa [#allocation4], 1

</llo_original>
